<compile_context>
chip_gen: v7x
topology: tpu7x:2x2x1
jax: 0.10.0
libtpu: 0.0.40
codegen_flags: <defaults>
</compile_context>

<pallas_src>
import math
import functools

import jax
import jax.numpy as jnp
from jax.experimental import pallas as pl
from jax.experimental.pallas import tpu as pltpu


# --------------------------------------------------------------------------
# Hardware / capability probes (cached; plain Python, safe at trace time)
# --------------------------------------------------------------------------
@functools.lru_cache(maxsize=1)
def _tpu_info():
    """Returns (generation string, vmem_capacity_bytes)."""
    kind = ""
    try:
        kind = jax.devices()[0].device_kind.lower()
    except Exception:
        pass
    if "v7" in kind or "7x" in kind:
        gen, cap = "v7x", 64 << 20
    elif "v6" in kind:
        gen, cap = "v6e", 128 << 20
    elif "v5" in kind:
        gen, cap = "v5e", 128 << 20
    else:
        gen, cap = "v6e", 128 << 20
    try:
        cap = int(pltpu.get_tpu_info().vmem_capacity_bytes)
    except Exception:
        pass
    return gen, cap


@functools.lru_cache(maxsize=1)
def _single_buffer_supported():
    """Probe once whether BlockSpec(pipeline_mode=pl.Buffered(1)) compiles/runs here."""
    try:
        def k(x_ref, o_ref):
            o_ref[...] = x_ref[...]
        f = pl.pallas_call(
            k,
            out_shape=jax.ShapeDtypeStruct((8, 128), jnp.float32),
            grid=(1,),
            in_specs=[pl.BlockSpec((8, 128), lambda i: (0, 0),
                                   pipeline_mode=pl.Buffered(1))],
            out_specs=pl.BlockSpec((8, 128), lambda i: (0, 0)),
        )
        jax.block_until_ready(f(jnp.zeros((8, 128), jnp.float32)))
        return True
    except Exception:
        return False


# --------------------------------------------------------------------------
# Kernel
# --------------------------------------------------------------------------
def _make_mha_kernel(causal_mask: bool, bf16_exp: bool):
    f32, bf16 = jnp.float32, jnp.bfloat16

    def kernel(q_ref, k_ref, v_ref,
               wq_ref, bq_ref, wk_ref, bk_ref, wv_ref, bv_ref,
               wo_ref, bo_ref, o_ref):
        bt, s, d = q_ref.shape
        dp = wq_ref.shape[1]

        # QKV projections on a fat (Bt*S, .) slab; bf16 MXU operands, f32 accumulate.
        q2 = q_ref[...].reshape(bt * s, d).astype(bf16)
        k2 = k_ref[...].reshape(bt * s, d).astype(bf16)
        v2 = v_ref[...].reshape(bt * s, d).astype(bf16)

        qp = (jnp.dot(q2, wq_ref[...], preferred_element_type=f32)
              + bq_ref[...]).reshape(bt, s, dp)     # 1/sqrt(D) pre-folded into wq/bq
        kp = (jnp.dot(k2, wk_ref[...], preferred_element_type=f32)
              + bk_ref[...]).reshape(bt, s, dp)
        vp = (jnp.dot(v2, wv_ref[...], preferred_element_type=f32)
              + bv_ref[...]).reshape(bt, s, dp)

        # scores[b,q,k] = sum_d qp[b,q,d]*kp[b,k,d]  (no explicit transpose copy)
        scores = jax.lax.dot_general(
            qp.astype(bf16), kp.astype(bf16),
            dimension_numbers=(((2,), (2,)), ((0,), (0,))),
            preferred_element_type=f32)             # (bt, s, s) f32

        if causal_mask:
            row = jax.lax.broadcasted_iota(jnp.int32, (s, s), 0)
            col = jax.lax.broadcasted_iota(jnp.int32, (s, s), 1)
            # diagonal is kept -> no all -inf rows
            scores = jnp.where((col > row)[None, :, :], -jnp.inf, scores)

        # Numerically stable softmax with DEFERRED normalization:
        #   z = (e @ vp) * 1/sum(e)   -- scales (bt,s,dp) instead of (bt,s,s).
        m = jnp.max(scores, axis=-1, keepdims=True)
        centered = scores - m
        if bf16_exp:
            e = jnp.exp(centered.astype(bf16))      # bf16 EUP path (v6e/v7x)
        else:
            e = jnp.exp(centered)                   # f32 (v5e has no bf16 EUP)
        l = jnp.sum(e.astype(f32), axis=-1, keepdims=True)

        z = jax.lax.dot_general(
            e.astype(bf16), vp.astype(bf16),
            dimension_numbers=(((2,), (1,)), ((0,), (0,))),
            preferred_element_type=f32)             # (bt, s, dp), unnormalized
        z = z * pl.reciprocal(l, approx=True)       # EUP reciprocal, broadcast mul

        # Output projection with the head-folded (Dp, D) weight -> true D output cols.
        out = (jnp.dot(z.reshape(bt * s, dp).astype(bf16), wo_ref[...],
                       preferred_element_type=f32)
               + bo_ref[...])                       # (bt*s, d)
        o_ref[...] = out.reshape(bt, s, d).astype(o_ref.dtype)

    return kernel


# --------------------------------------------------------------------------
# Wrapper
# --------------------------------------------------------------------------
def _pad_cols(w, cols):
    pad = cols - w.shape[-1]
    if pad == 0:
        return w
    return jnp.pad(w, [(0, 0)] * (w.ndim - 1) + [(0, pad)])


def _pad_rows(w, rows):
    pad = rows - w.shape[0]
    if pad == 0:
        return w
    return jnp.pad(w, [(0, pad)] + [(0, 0)] * (w.ndim - 1))


def _choose_bt(B, S, D, Dp, target_rows, vmem_budget, min_grid_steps):
    """Largest batch tile whose per-step VMEM working set fits the budget."""
    def step_bytes(bt):
        rows = bt * S
        io = 4 * rows * D * (3 * 2 + 2)              # double-buffered Q/K/V in + out blocks (f32)
        wts = 2 * 4 * D * Dp + 4 * 4 * Dp            # bf16 weights + f32 biases (~single-buffered)
        act = 4 * rows * Dp * 6 + 4 * rows * S * 3   # qp/kp/vp/z (+bf16 copies), scores/e/tmp
        return io + wts + act

    best = 1
    for bt in range(1, B + 1):
        if B % bt:
            continue
        if step_bytes(bt) > vmem_budget:
            break
        best = bt
        if bt * S >= target_rows:
            break
    # Keep at least `min_grid_steps` steps (v7x: 2 TensorCores to feed).
    while best > 1 and B // best < min_grid_steps:
        best -= 1
        while best > 1 and B % best:
            best -= 1
    return best


@functools.partial(jax.jit, static_argnames=("num_heads", "mask"))
def multi_head_attention(Q, K, V, params, num_heads, mask=False):
    """Q, K, V: (B, S, D) float32; params stores W^T weights and (1, D) biases."""
    B, S, D = Q.shape
    gen, vmem_cap = _tpu_info()
    vmem_limit = int(vmem_cap * 0.75)                 # headroom (v7x has only 64 MiB total)
    bt_budget = min(32 << 20, vmem_limit // 3)        # ~32 MiB v5e/v6e, ~16 MiB v7x
    target_rows = 256 if gen == "v5e" else 512        # MXU M target per generation
    min_grid_steps = 2 if (gen == "v7x" and B >= 2) else 1
    bf16_exp = gen != "v5e"
    single_buf_w = _single_buffer_supported()

    scale = jnp.float32(1.0 / math.sqrt(D))

    # --- wrapper-side algebraic folds (exact up to fp reassociation) ---------
    wq_t = params["wq_t"] * scale                     # fold 1/sqrt(D) into Wq, bq
    bq = params["bq"] * scale
    wo_eff = params["wo_t"].reshape(num_heads, D, D).sum(axis=0)   # fold H-way concat

    # --- lane-dense projected-feature dim; pad WEIGHTS only (exact) ----------
    Dp = max(128, ((D + 127) // 128) * 128)
    to_bf16 = lambda w: w.astype(jnp.bfloat16)        # MXU operands in bf16
    wq_p = to_bf16(_pad_cols(wq_t, Dp))               # (D, Dp)
    wk_p = to_bf16(_pad_cols(params["wk_t"], Dp))
    wv_p = to_bf16(_pad_cols(params["wv_t"], Dp))
    wo_p = to_bf16(_pad_rows(wo_eff, Dp))             # (Dp, D); padded rows meet zero z cols
    bq_p = _pad_cols(bq, Dp)                          # biases stay f32
    bk_p = _pad_cols(params["bk"], Dp)
    bv_p = _pad_cols(params["bv"], Dp)
    bo_p = params["bo"]

    Bt = _choose_bt(B, S, D, Dp, target_rows, bt_budget, min_grid_steps)
    kernel = _make_mha_kernel(bool(mask), bf16_exp)

    def const_spec(shape):
        # Grid-invariant weights/biases: single-buffer when supported (halves weight VMEM).
        if single_buf_w:
            return pl.BlockSpec(shape, lambda b: (0,) * len(shape),
                                pipeline_mode=pl.Buffered(1))
        return pl.BlockSpec(shape, lambda b: (0,) * len(shape))

    qkv_spec = pl.BlockSpec((Bt, S, D), lambda b: (b, 0, 0))

    out = pl.pallas_call(
        kernel,
        out_shape=jax.ShapeDtypeStruct((B, S, D), jnp.float32),
        grid_spec=pltpu.PrefetchScalarGridSpec(
            num_scalar_prefetch=0,
            grid=(B // Bt,),
            in_specs=[qkv_spec, qkv_spec, qkv_spec,
                      const_spec((D, Dp)), const_spec((1, Dp)),
                      const_spec((D, Dp)), const_spec((1, Dp)),
                      const_spec((D, Dp)), const_spec((1, Dp)),
                      const_spec((Dp, D)), const_spec((1, D))],
            out_specs=pl.BlockSpec((Bt, S, D), lambda b: (b, 0, 0)),
        ),
        compiler_params=pltpu.CompilerParams(
            dimension_semantics=("parallel",),
            vmem_limit_bytes=vmem_limit),
    )(Q, K, V, wq_p, bq_p, wk_p, bk_p, wv_p, bv_p, wo_p, bo_p)

    return out


# --------------------------------------------------------------------------
# Pure-JAX reference (unfolded, f32) mirroring the PyTorch forward.
# --------------------------------------------------------------------------
def reference_mha(Q, K, V, params, num_heads, mask=False):
    qp = Q @ params["wq_t"] + params["bq"][0]
    kp = K @ params["wk_t"] + params["bk"][0]
    vp = V @ params["wv_t"] + params["bv"][0]
    scores = (qp @ jnp.swapaxes(kp, -1, -2)) / jnp.sqrt(jnp.float32(Q.shape[-1]))
    if mask:
        s = scores.shape[-1]
        tri = jnp.triu(jnp.ones((s, s), dtype=bool), k=1)
        scores = jnp.where(tri, -jnp.inf, scores)
    p = jax.nn.softmax(scores, axis=-1)
    z = p @ vp
    z_cat = jnp.concatenate([z] * num_heads, axis=-1)
    return z_cat @ params["wo_t"] + params["bo"][0]


def init_params(key, dim_input, num_heads):
    """Deterministic init; shapes match nn.Linear weights (stored pre-transposed)."""
    D, H = dim_input, num_heads
    ks = jax.random.split(key, 8)
    bound = 1.0 / math.sqrt(D)
    bound_o = 1.0 / math.sqrt(D * H)
    u = lambda k, shape, b: jax.random.uniform(k, shape, jnp.float32, -b, b)
    return {
        # nn.Linear(D, D): weight (D, D) -> store W^T (D, D); bias stored as (1, D)
        "wq_t": u(ks[0], (D, D), bound), "bq": u(ks[1], (1, D), bound),
        "wk_t": u(ks[2], (D, D), bound), "bk": u(ks[3], (1, D), bound),
        "wv_t": u(ks[4], (D, D), bound), "bv": u(ks[5], (1, D), bound),
        # nn.Linear(D*H, D): weight (D, D*H) -> store W^T (D*H, D); bias (1, D)
        "wo_t": u(ks[6], (D * H, D), bound_o), "bo": u(ks[7], (1, D), bound_o),
    }


if __name__ == "__main__":
    B, S, D, H = 2, 8, 32, 4   # batch, seq, dim_input, num_heads

    # Warm the hardware/capability caches outside of any jit trace.
    _tpu_info()
    _single_buffer_supported()

    key = jax.random.PRNGKey(0)
    kq, kk, kv, kp = jax.random.split(key, 4)
    Q = jax.random.normal(kq, (B, S, D), jnp.float32)
    K = jax.random.normal(kk, (B, S, D), jnp.float32)
    V = jax.random.normal(kv, (B, S, D), jnp.float32)
    params = init_params(kp, D, H)

    out = multi_head_attention(Q, K, V, params, num_heads=H, mask=False)
    out = jax.block_until_ready(out)

    ref = reference_mha(Q, K, V, params, num_heads=H, mask=False)
    assert out.shape == (B, S, D)
    # bf16 MXU operands + bf16 exp + approx reciprocal -> bf16-level tolerance
    assert jnp.allclose(out, ref, atol=2e-2, rtol=2e-2), "mismatch vs reference"

    # also exercise the causal-mask path
    out_m = jax.block_until_ready(
        multi_head_attention(Q, K, V, params, num_heads=H, mask=True))
    ref_m = reference_mha(Q, K, V, params, num_heads=H, mask=True)
    assert jnp.allclose(out_m, ref_m, atol=2e-2, rtol=2e-2), "mismatch vs reference (mask)"

    print("KERNEL_OK")
</pallas_src>

<mosaic_0001>
module attributes {stable_mosaic.version = 11 : i64} {
  func.func @k(%arg0: i32, %arg1: memref<8x128xf32, #tpu.memory_space<vmem>>, %arg2: memref<8x128xf32, #tpu.memory_space<vmem>>) attributes {dimension_semantics = [#tpu.dimension_semantics<arbitrary>], iteration_bounds = array<i64: 1>, scalar_prefetch = 0 : i64, scratch_operands = 0 : i64, tpu.core_type = #tpu.core_type<tc>, window_params = [{pipeline_mode = #tpu.pipeline_mode<synchronous>, transform_indices = @transform_0, window_bounds = array<i64: 8, 128>}, {pipeline_mode = #tpu.pipeline_mode<synchronous>, transform_indices = @transform_1, window_bounds = array<i64: 8, 128>}]} {
    %c0 = arith.constant 0 : index
    %c0_0 = arith.constant 0 : index
    %0 = vector.load %arg1[%c0, %c0_0] : memref<8x128xf32, #tpu.memory_space<vmem>>, vector<8x128xf32>
    %c0_1 = arith.constant 0 : index
    %c0_2 = arith.constant 0 : index
    %1 = vector.load %arg2[%c0_1, %c0_2] : memref<8x128xf32, #tpu.memory_space<vmem>>, vector<8x128xf32>
    tpu.vector_store %arg2[%c0_1, %c0_2], %0 {strides = array<i32>} : memref<8x128xf32, #tpu.memory_space<vmem>>, vector<8x128xf32>,
    return
  }
  func.func @transform_0(%arg0: i32) -> (i32, i32) {
    %c0_i32 = arith.constant 0 : i32
    %c0_i32_0 = arith.constant 0 : i32
    %c0_i32_1 = arith.constant 0 : i32
    return %c0_i32, %c0_i32_0 : i32, i32
  }
  func.func @transform_1(%arg0: i32) -> (i32, i32) {
    %c0_i32 = arith.constant 0 : i32
    %c0_i32_0 = arith.constant 0 : i32
    %c0_i32_1 = arith.constant 0 : i32
    return %c0_i32, %c0_i32_0 : i32, i32
  }
}

module attributes {stable_mosaic.version = 11 : i64} {
  func.func @kernel(%arg0: i32, %arg1: memref<2x8x32xf32, #tpu.memory_space<vmem>>, %arg2: memref<2x8x32xf32, #tpu.memory_space<vmem>>, %arg3: memref<2x8x32xf32, #tpu.memory_space<vmem>>, %arg4: memref<32x128xbf16, #tpu.memory_space<vmem>>, %arg5: memref<1x128xf32, #tpu.memory_space<vmem>>, %arg6: memref<32x128xbf16, #tpu.memory_space<vmem>>, %arg7: memref<1x128xf32, #tpu.memory_space<vmem>>, %arg8: memref<32x128xbf16, #tpu.memory_space<vmem>>, %arg9: memref<1x128xf32, #tpu.memory_space<vmem>>, %arg10: memref<128x32xbf16, #tpu.memory_space<vmem>>, %arg11: memref<1x32xf32, #tpu.memory_space<vmem>>, %arg12: memref<2x8x32xf32, #tpu.memory_space<vmem>>) attributes {dimension_semantics = [#tpu.dimension_semantics<parallel>], iteration_bounds = array<i64: 1>, scalar_prefetch = 0 : i64, scratch_operands = 0 : i64, tpu.core_type = #tpu.core_type<tc>, window_params = [{transform_indices = @transform_0, window_bounds = array<i64: 2, 8, 32>}, {transform_indices = @transform_1, window_bounds = array<i64: 2, 8, 32>}, {transform_indices = @transform_2, window_bounds = array<i64: 2, 8, 32>}, {pipeline_mode = #tpu.pipeline_mode<synchronous>, transform_indices = @transform_3, window_bounds = array<i64: 32, 128>}, {pipeline_mode = #tpu.pipeline_mode<synchronous>, transform_indices = @transform_4, window_bounds = array<i64: 1, 128>}, {pipeline_mode = #tpu.pipeline_mode<synchronous>, transform_indices = @transform_5, window_bounds = array<i64: 32, 128>}, {pipeline_mode = #tpu.pipeline_mode<synchronous>, transform_indices = @transform_6, window_bounds = array<i64: 1, 128>}, {pipeline_mode = #tpu.pipeline_mode<synchronous>, transform_indices = @transform_7, window_bounds = array<i64: 32, 128>}, {pipeline_mode = #tpu.pipeline_mode<synchronous>, transform_indices = @transform_8, window_bounds = array<i64: 1, 128>}, {pipeline_mode = #tpu.pipeline_mode<synchronous>, transform_indices = @transform_9, window_bounds = array<i64: 128, 32>}, {pipeline_mode = #tpu.pipeline_mode<synchronous>, transform_indices = @transform_10, window_bounds = array<i64: 1, 32>}, {transform_indices = @transform_11, window_bounds = array<i64: 2, 8, 32>}]} {
    %c0 = arith.constant 0 : index
    %c0_0 = arith.constant 0 : index
    %c0_1 = arith.constant 0 : index
    %0 = vector.load %arg1[%c0, %c0_0, %c0_1] : memref<2x8x32xf32, #tpu.memory_space<vmem>>, vector<2x8x32xf32>
    %1 = vector.shape_cast %0 : vector<2x8x32xf32> to vector<16x32xf32>
    %2 = arith.truncf %1 : vector<16x32xf32> to vector<16x32xbf16>
    %c0_2 = arith.constant 0 : index
    %c0_3 = arith.constant 0 : index
    %c0_4 = arith.constant 0 : index
    %3 = vector.load %arg2[%c0_2, %c0_3, %c0_4] : memref<2x8x32xf32, #tpu.memory_space<vmem>>, vector<2x8x32xf32>
    %4 = vector.shape_cast %3 : vector<2x8x32xf32> to vector<16x32xf32>
    %5 = arith.truncf %4 : vector<16x32xf32> to vector<16x32xbf16>
    %c0_5 = arith.constant 0 : index
    %c0_6 = arith.constant 0 : index
    %c0_7 = arith.constant 0 : index
    %6 = vector.load %arg3[%c0_5, %c0_6, %c0_7] : memref<2x8x32xf32, #tpu.memory_space<vmem>>, vector<2x8x32xf32>
    %7 = vector.shape_cast %6 : vector<2x8x32xf32> to vector<16x32xf32>
    %8 = arith.truncf %7 : vector<16x32xf32> to vector<16x32xbf16>
    %c0_8 = arith.constant 0 : index
    %c0_9 = arith.constant 0 : index
    %9 = vector.load %arg4[%c0_8, %c0_9] : memref<32x128xbf16, #tpu.memory_space<vmem>>, vector<32x128xbf16>
    %cst = arith.constant dense<0.000000e+00> : vector<16x128xf32>
    %10 = tpu.matmul %2, %9, %cst {dimension_numbers = #tpu.dot_dimension_numbers<[1], [0], [0], [1], [0, 0, 1, 1], [], []>} : vector<16x32xbf16>, vector<32x128xbf16>, vector<16x128xf32> -> vector<16x128xf32>
    %c0_10 = arith.constant 0 : index
    %c0_11 = arith.constant 0 : index
    %11 = vector.load %arg5[%c0_10, %c0_11] : memref<1x128xf32, #tpu.memory_space<vmem>>, vector<1x128xf32>
    %12 = vector.broadcast %11 : vector<1x128xf32> to vector<16x128xf32>
    %13 = arith.addf %10, %12 : vector<16x128xf32>
    %14 = vector.shape_cast %13 : vector<16x128xf32> to vector<2x8x128xf32>
    %c0_12 = arith.constant 0 : index
    %c0_13 = arith.constant 0 : index
    %15 = vector.load %arg6[%c0_12, %c0_13] : memref<32x128xbf16, #tpu.memory_space<vmem>>, vector<32x128xbf16>
    %cst_14 = arith.constant dense<0.000000e+00> : vector<16x128xf32>
    %16 = tpu.matmul %5, %15, %cst_14 {dimension_numbers = #tpu.dot_dimension_numbers<[1], [0], [0], [1], [0, 0, 1, 1], [], []>} : vector<16x32xbf16>, vector<32x128xbf16>, vector<16x128xf32> -> vector<16x128xf32>
    %c0_15 = arith.constant 0 : index
    %c0_16 = arith.constant 0 : index
    %17 = vector.load %arg7[%c0_15, %c0_16] : memref<1x128xf32, #tpu.memory_space<vmem>>, vector<1x128xf32>
    %18 = vector.broadcast %17 : vector<1x128xf32> to vector<16x128xf32>
    %19 = arith.addf %16, %18 : vector<16x128xf32>
    %20 = vector.shape_cast %19 : vector<16x128xf32> to vector<2x8x128xf32>
    %c0_17 = arith.constant 0 : index
    %c0_18 = arith.constant 0 : index
    %21 = vector.load %arg8[%c0_17, %c0_18] : memref<32x128xbf16, #tpu.memory_space<vmem>>, vector<32x128xbf16>
    %cst_19 = arith.constant dense<0.000000e+00> : vector<16x128xf32>
    %22 = tpu.matmul %8, %21, %cst_19 {dimension_numbers = #tpu.dot_dimension_numbers<[1], [0], [0], [1], [0, 0, 1, 1], [], []>} : vector<16x32xbf16>, vector<32x128xbf16>, vector<16x128xf32> -> vector<16x128xf32>
    %c0_20 = arith.constant 0 : index
    %c0_21 = arith.constant 0 : index
    %23 = vector.load %arg9[%c0_20, %c0_21] : memref<1x128xf32, #tpu.memory_space<vmem>>, vector<1x128xf32>
    %24 = vector.broadcast %23 : vector<1x128xf32> to vector<16x128xf32>
    %25 = arith.addf %22, %24 : vector<16x128xf32>
    %26 = vector.shape_cast %25 : vector<16x128xf32> to vector<2x8x128xf32>
    %27 = arith.truncf %14 : vector<2x8x128xf32> to vector<2x8x128xbf16>
    %28 = arith.truncf %20 : vector<2x8x128xf32> to vector<2x8x128xbf16>
    %cst_22 = arith.constant dense<0.000000e+00> : vector<2x8x8xf32>
    %29 = tpu.matmul %27, %28, %cst_22 {dimension_numbers = #tpu.dot_dimension_numbers<[2], [2], [1], [1], [0, 0, 0, 1, 1, 1], [0], [0]>} : vector<2x8x128xbf16>, vector<2x8x128xbf16>, vector<2x8x8xf32> -> vector<2x8x8xf32>
    %cst_23 = arith.constant dense<0xFF800000> : vector<2x8xf32>
    %30 = vector.multi_reduction <maximumf>, %29, %cst_23 [2] : vector<2x8x8xf32> to vector<2x8xf32>
    %31 = vector.shape_cast %30 : vector<2x8xf32> to vector<2x8x1xf32>
    %32 = vector.broadcast %31 : vector<2x8x1xf32> to vector<2x8x8xf32>
    %33 = arith.subf %29, %32 : vector<2x8x8xf32>
    %34 = arith.truncf %33 : vector<2x8x8xf32> to vector<2x8x8xbf16>
    %35 = math.exp %34 : vector<2x8x8xbf16>
    %36 = arith.extf %35 : vector<2x8x8xbf16> to vector<2x8x8xf32>
    %cst_24 = arith.constant dense<0.000000e+00> : vector<2x8xf32>
    %37 = vector.multi_reduction <add>, %36, %cst_24 [2] : vector<2x8x8xf32> to vector<2x8xf32>
    %38 = vector.shape_cast %37 : vector<2x8xf32> to vector<2x8x1xf32>
    %39 = arith.truncf %26 : vector<2x8x128xf32> to vector<2x8x128xbf16>
    %cst_25 = arith.constant dense<0.000000e+00> : vector<2x8x128xf32>
    %40 = tpu.matmul %35, %39, %cst_25 {dimension_numbers = #tpu.dot_dimension_numbers<[2], [1], [1], [2], [0, 0, 0, 1, 1, 2], [0], [0]>} : vector<2x8x8xbf16>, vector<2x8x128xbf16>, vector<2x8x128xf32> -> vector<2x8x128xf32>
    %41 = tpu.reciprocal %38 {approx = true} : vector<2x8x1xf32> -> vector<2x8x1xf32>
    %42 = vector.broadcast %41 : vector<2x8x1xf32> to vector<2x8x128xf32>
    %43 = arith.mulf %40, %42 : vector<2x8x128xf32>
    %44 = vector.shape_cast %43 : vector<2x8x128xf32> to vector<16x128xf32>
    %45 = arith.truncf %44 : vector<16x128xf32> to vector<16x128xbf16>
    %c0_26 = arith.constant 0 : index
    %c0_27 = arith.constant 0 : index
    %46 = vector.load %arg10[%c0_26, %c0_27] : memref<128x32xbf16, #tpu.memory_space<vmem>>, vector<128x32xbf16>
    %cst_28 = arith.constant dense<0.000000e+00> : vector<16x32xf32>
    %47 = tpu.matmul %45, %46, %cst_28 {dimension_numbers = #tpu.dot_dimension_numbers<[1], [0], [0], [1], [0, 0, 1, 1], [], []>} : vector<16x128xbf16>, vector<128x32xbf16>, vector<16x32xf32> -> vector<16x32xf32>
    %c0_29 = arith.constant 0 : index
    %c0_30 = arith.constant 0 : index
    %48 = vector.load %arg11[%c0_29, %c0_30] : memref<1x32xf32, #tpu.memory_space<vmem>>, vector<1x32xf32>
    %49 = vector.broadcast %48 : vector<1x32xf32> to vector<16x32xf32>
    %50 = arith.addf %47, %49 : vector<16x32xf32>
    %51 = vector.shape_cast %50 : vector<16x32xf32> to vector<2x8x32xf32>
    %c0_31 = arith.constant 0 : index
    %c0_32 = arith.constant 0 : index
    %c0_33 = arith.constant 0 : index
    %52 = vector.load %arg12[%c0_31, %c0_32, %c0_33] : memref<2x8x32xf32, #tpu.memory_space<vmem>>, vector<2x8x32xf32>
    tpu.vector_store %arg12[%c0_31, %c0_32, %c0_33], %51 {strides = array<i32>} : memref<2x8x32xf32, #tpu.memory_space<vmem>>, vector<2x8x32xf32>,
    return
  }
  func.func @transform_0(%arg0: i32) -> (i32, i32, i32) {
    %c0_i32 = arith.constant 0 : i32
    %c0_i32_0 = arith.constant 0 : i32
    %c0_i32_1 = arith.constant 0 : i32
    return %arg0, %c0_i32, %c0_i32_0 : i32, i32, i32
  }
  func.func @transform_1(%arg0: i32) -> (i32, i32, i32) {
    %c0_i32 = arith.constant 0 : i32
    %c0_i32_0 = arith.constant 0 : i32
    %c0_i32_1 = arith.constant 0 : i32
    return %arg0, %c0_i32, %c0_i32_0 : i32, i32, i32
  }
  func.func @transform_2(%arg0: i32) -> (i32, i32, i32) {
    %c0_i32 = arith.constant 0 : i32
    %c0_i32_0 = arith.constant 0 : i32
    %c0_i32_1 = arith.constant 0 : i32
    return %arg0, %c0_i32, %c0_i32_0 : i32, i32, i32
  }
  func.func @transform_3(%arg0: i32) -> (i32, i32) {
    %c0_i32 = arith.constant 0 : i32
    %c0_i32_0 = arith.constant 0 : i32
    %c0_i32_1 = arith.constant 0 : i32
    return %c0_i32, %c0_i32_0 : i32, i32
  }
  func.func @transform_4(%arg0: i32) -> (i32, i32) {
    %c0_i32 = arith.constant 0 : i32
    %c0_i32_0 = arith.constant 0 : i32
    %c0_i32_1 = arith.constant 0 : i32
    return %c0_i32, %c0_i32_0 : i32, i32
  }
  func.func @transform_5(%arg0: i32) -> (i32, i32) {
    %c0_i32 = arith.constant 0 : i32
    %c0_i32_0 = arith.constant 0 : i32
    %c0_i32_1 = arith.constant 0 : i32
    return %c0_i32, %c0_i32_0 : i32, i32
  }
  func.func @transform_6(%arg0: i32) -> (i32, i32) {
    %c0_i32 = arith.constant 0 : i32
    %c0_i32_0 = arith.constant 0 : i32
    %c0_i32_1 = arith.constant 0 : i32
    return %c0_i32, %c0_i32_0 : i32, i32
  }
  func.func @transform_7(%arg0: i32) -> (i32, i32) {
    %c0_i32 = arith.constant 0 : i32
    %c0_i32_0 = arith.constant 0 : i32
    %c0_i32_1 = arith.constant 0 : i32
    return %c0_i32, %c0_i32_0 : i32, i32
  }
  func.func @transform_8(%arg0: i32) -> (i32, i32) {
    %c0_i32 = arith.constant 0 : i32
    %c0_i32_0 = arith.constant 0 : i32
    %c0_i32_1 = arith.constant 0 : i32
    return %c0_i32, %c0_i32_0 : i32, i32
  }
  func.func @transform_9(%arg0: i32) -> (i32, i32) {
    %c0_i32 = arith.constant 0 : i32
    %c0_i32_0 = arith.constant 0 : i32
    %c0_i32_1 = arith.constant 0 : i32
    return %c0_i32, %c0_i32_0 : i32, i32
  }
  func.func @transform_10(%arg0: i32) -> (i32, i32) {
    %c0_i32 = arith.constant 0 : i32
    %c0_i32_0 = arith.constant 0 : i32
    %c0_i32_1 = arith.constant 0 : i32
    return %c0_i32, %c0_i32_0 : i32, i32
  }
  func.func @transform_11(%arg0: i32) -> (i32, i32, i32) {
    %c0_i32 = arith.constant 0 : i32
    %c0_i32_0 = arith.constant 0 : i32
    %c0_i32_1 = arith.constant 0 : i32
    return %arg0, %c0_i32, %c0_i32_0 : i32, i32, i32
  }
}

</mosaic_0001>

<llo_original>
// kernel: tpu_custom_call.1
$region0: #{tpu_custom_call.1}
  #allocation0 [shape = 'u32[]', space=smem, size = 0x4, offset = 0x4, fixed_abs, tag = 'smem constant byte address 0x4 - core index']
  #allocation1 [shape = 'u32[144,128]{1,0:T(1,128)}', space=vmem, size = 0x12000, scoped, tag = 'internal scratch']
  %s0 = inlined_call_operand.hbm [shape: f32[8,128], index: 0, kind: input, shape index: {}]
  %s1 = inlined_call_operand.hbm [shape: f32[8,128], index: 1, kind: output, shape index: {}]
  %s2 = sld [smem:[#allocation0]]
  $region18: #{tpu_custom_call.1} parent=0
    _
  %s4 = ssub.s32 1, %s2
  %s5 = scalar_select 0, %s4, %s2
  $region1: #{tpu_custom_call.1} parent=0
    #allocation2 [shape = 'u8[4096]{0}', space=vmem, size = 0x1000, scoped, tag = 'input window, operand 0, single buffered']
    #allocation3 [shape = 's32[1]{0}', space=sflag, size = 0x4, scoped, tag = 'scoped memory for tpu_custom_call.1']
    #allocation4 [shape = 's32[1]{0}', space=sflag, size = 0x4, scoped, tag = 'scoped memory for tpu_custom_call.1']
    #allocation5 [shape = 'u8[4096]{0}', space=vmem, size = 0x1000, scoped, tag = 'output window, operand 0, single buffered']
    %6 = vsyncpa [#allocation3], 0
    %7 = vsyncpa [#allocation4], 0
    // Predicated region
    $region2: #{tpu_custom_call.1} parent=1 // pred_check
      _
    $region3: #{tpu_custom_call.1} parent=1 // pred_check_branch
      %9 = sbr.rel (0) target = $region5
    $region4: #{tpu_custom_call.1} parent=1 // pred_region
      %s11 = ssub.s32 128, 128
      %12 = vsyncadd [#allocation3], %s11
      %s14 = sshll.u32 [#allocation2], 4
      %s15 = int_to_ptr.vmem [resolvable:$true] %s14
      %17 = dma.hbm_to_vmem [thread:$0]  %s0, 128, %s15, [#allocation3]
    $region5: #{tpu_custom_call.1} parent=1 // pred_fallthru
      _
    // Predicated region
    $region6: #{tpu_custom_call.1} parent=1 // pred_check
      _
    $region7: #{tpu_custom_call.1} parent=1 // pred_check_branch
      %19 = sbr.rel (0) target = $region9
    $region8: #{tpu_custom_call.1} parent=1 // pred_region
      %20 = dma.done [#allocation3], 128
    $region9: #{tpu_custom_call.1} parent=1 // pred_fallthru
      _
    %v21 = vld [vmem:[#allocation2] sm:$0xff]
    %22 = vst [vmem:[#allocation5] sm:$0xff] %v21
    // Predicated region
    $region10: #{tpu_custom_call.1} parent=1 // pred_check
      _
    $region11: #{tpu_custom_call.1} parent=1 // pred_check_branch
      %24 = sbr.rel (0) target = $region13
    $region12: #{tpu_custom_call.1} parent=1 // pred_region
      %s26 = ssub.s32 128, 128
      %27 = vsyncadd [#allocation4], %s26
      %s29 = sshll.u32 [#allocation5], 4
      %s30 = int_to_ptr.vmem [resolvable:$true] %s29
      %32 = dma.vmem_to_hbm [thread:$0]  %s30, 128, %s1, [#allocation4]
    $region13: #{tpu_custom_call.1} parent=1 // pred_fallthru
      _
    // Predicated region
    $region14: #{tpu_custom_call.1} parent=1 // pred_check
      _
    $region15: #{tpu_custom_call.1} parent=1 // pred_check_branch
      %34 = sbr.rel (0) target = $region17
    $region16: #{tpu_custom_call.1} parent=1 // pred_region
      %35 = dma.done [#allocation4], 128
    $region17: #{tpu_custom_call.1} parent=1 // pred_fallthru
      _
    %36 = vsyncpa [#allocation3], 1
    %37 = vsyncpa [#allocation4], 1

// kernel: multi_head_attention.1
$region0: #{multi_head_attention.1}
  #allocation0 [shape = 'u32[]', space=smem, size = 0x4, offset = 0x4, fixed_abs, tag = 'smem constant byte address 0x4 - core index']
  #allocation1 [shape = 'u32[144,128]{1,0:T(1,128)}', space=vmem, size = 0x12000, scoped, tag = 'internal scratch']
  %s0 = inlined_call_operand.hbm [shape: f32[2,8,32], index: 0, kind: input, shape index: {}]
  %s1 = inlined_call_operand.hbm [shape: f32[2,8,32], index: 1, kind: input, shape index: {}]
  %s2 = inlined_call_operand.hbm [shape: f32[2,8,32], index: 2, kind: input, shape index: {}]
  %s3 = inlined_call_operand.hbm [shape: bf16[32,128], index: 3, kind: input, shape index: {}]
  %s4 = inlined_call_operand.hbm [shape: f32[1,128], index: 4, kind: input, shape index: {}]
  %s5 = inlined_call_operand.hbm [shape: bf16[32,128], index: 5, kind: input, shape index: {}]
  %s6 = inlined_call_operand.hbm [shape: f32[1,128], index: 6, kind: input, shape index: {}]
  %s7 = inlined_call_operand.hbm [shape: bf16[32,128], index: 7, kind: input, shape index: {}]
  %s8 = inlined_call_operand.hbm [shape: f32[1,128], index: 8, kind: input, shape index: {}]
  %s9 = inlined_call_operand.hbm [shape: bf16[128,32], index: 9, kind: input, shape index: {}]
  %s10 = inlined_call_operand.hbm [shape: f32[1,32], index: 10, kind: input, shape index: {}]
  %s11 = inlined_call_operand.hbm [shape: f32[2,8,32], index: 11, kind: output, shape index: {}]
  %s12 = sld [smem:[#allocation0]]
  $region98: #{multi_head_attention.1} parent=0
    _
  %s14 = ssub.s32 1, %s12
  %s15 = scalar_select 0, %s14, %s12
  $region1: #{multi_head_attention.1} parent=0
    #allocation2 [shape = 'u8[8192]{0}', space=vmem, size = 0x2000, scoped, tag = 'input window, operand 0, single buffered']
    #allocation3 [shape = 's32[1]{0}', space=sflag, size = 0x4, scoped, tag = 'scoped memory for multi_head_attention.1']
    #allocation4 [shape = 's32[1]{0}', space=sflag, size = 0x4, scoped, tag = 'scoped memory for multi_head_attention.1']
    #allocation5 [shape = 'u8[8192]{0}', space=vmem, size = 0x2000, scoped, tag = 'input window, operand 1, single buffered']
    #allocation6 [shape = 's32[1]{0}', space=sflag, size = 0x4, scoped, tag = 'scoped memory for multi_head_attention.1']
    #allocation7 [shape = 'u8[8192]{0}', space=vmem, size = 0x2000, scoped, tag = 'input window, operand 2, single buffered']
    #allocation8 [shape = 'u8[8192]{0}', space=vmem, size = 0x2000, scoped, tag = 'input window, operand 3, single buffered']
    #allocation9 [shape = 's32[1]{0}', space=sflag, size = 0x4, scoped, tag = 'scoped memory for multi_head_attention.1']
    #allocation10 [shape = 'u8[512]{0}', space=vmem, size = 0x400, scoped, tag = 'input window, operand 4, single buffered']
    #allocation11 [shape = 'u8[8192]{0}', space=vmem, size = 0x2000, scoped, tag = 'input window, operand 5, single buffered']
    #allocation12 [shape = 's32[1]{0}', space=sflag, size = 0x4, scoped, tag = 'scoped memory for multi_head_attention.1']
    #allocation13 [shape = 'u8[512]{0}', space=vmem, size = 0x400, scoped, tag = 'input window, operand 6, single buffered']
    #allocation14 [shape = 'u8[8192]{0}', space=vmem, size = 0x2000, scoped, tag = 'input window, operand 7, single buffered']
    #allocation15 [shape = 's32[1]{0}', space=sflag, size = 0x4, scoped, tag = 'scoped memory for multi_head_attention.1']
    #allocation16 [shape = 'u8[512]{0}', space=vmem, size = 0x400, scoped, tag = 'input window, operand 8, single buffered']
    #allocation17 [shape = 'u8[32768]{0}', space=vmem, size = 0x8000, scoped, tag = 'input window, operand 9, single buffered']
    #allocation18 [shape = 's32[1]{0}', space=sflag, size = 0x4, scoped, tag = 'scoped memory for multi_head_attention.1']
    #allocation19 [shape = 'u8[512]{0}', space=vmem, size = 0x400, scoped, tag = 'input window, operand 10, single buffered']
    #allocation20 [shape = 'u8[8192]{0}', space=vmem, size = 0x2000, scoped, tag = 'output window, operand 0, single buffered']
    %16 = vsyncpa [#allocation3], 0
    %17 = vsyncpa [#allocation6], 0
    %18 = vsyncpa [#allocation9], 0
    %19 = vsyncpa [#allocation12], 0
    %20 = vsyncpa [#allocation15], 0
    %21 = vsyncpa [#allocation18], 0
    %22 = vsyncpa [#allocation4], 0
    // Predicated region
    $region2: #{multi_head_attention.1} parent=1 // pred_check
      _
    $region3: #{multi_head_attention.1} parent=1 // pred_check_branch
      %24 = sbr.rel (0) target = $region5
    $region4: #{multi_head_attention.1} parent=1 // pred_region
      %s26 = ssub.s32 256, 256
      %27 = vsyncadd [#allocation3], %s26
      %s28 = sshll.u32 [#allocation2], 4
      %s29 = int_to_ptr.vmem [resolvable:$true] %s28
      %34 = dma.hbm_to_vmem [thread:$0]  %s0, 256, %s29, [#allocation3], 128, 128, 8
    $region5: #{multi_head_attention.1} parent=1 // pred_fallthru
      _
    // Predicated region
    $region6: #{multi_head_attention.1} parent=1 // pred_check
      _
    $region7: #{multi_head_attention.1} parent=1 // pred_check_branch
      %36 = sbr.rel (0) target = $region9
    $region8: #{multi_head_attention.1} parent=1 // pred_region
      %s38 = ssub.s32 256, 256
      %39 = vsyncadd [#allocation6], %s38
      %s40 = sshll.u32 [#allocation5], 4
      %s41 = int_to_ptr.vmem [resolvable:$true] %s40
      %46 = dma.hbm_to_vmem [thread:$0]  %s1, 256, %s41, [#allocation6], 128, 128, 8
    $region9: #{multi_head_attention.1} parent=1 // pred_fallthru
      _
    // Predicated region
    $region10: #{multi_head_attention.1} parent=1 // pred_check
      _
    $region11: #{multi_head_attention.1} parent=1 // pred_check_branch
      %48 = sbr.rel (0) target = $region13
    $region12: #{multi_head_attention.1} parent=1 // pred_region
      %s50 = ssub.s32 256, 256
      %51 = vsyncadd [#allocation6], %s50
      %s52 = sshll.u32 [#allocation7], 4
      %s53 = int_to_ptr.vmem [resolvable:$true] %s52
      %58 = dma.hbm_to_vmem [thread:$0]  %s2, 256, %s53, [#allocation6], 128, 128, 8
    $region13: #{multi_head_attention.1} parent=1 // pred_fallthru
      _
    // Predicated region
    $region14: #{multi_head_attention.1} parent=1 // pred_check
      _
    $region15: #{multi_head_attention.1} parent=1 // pred_check_branch
      %60 = sbr.rel (0) target = $region17
    $region16: #{multi_head_attention.1} parent=1 // pred_region
      %s62 = ssub.s32 256, 256
      %63 = vsyncadd [#allocation9], %s62
      %s64 = sshll.u32 [#allocation8], 4
      %s65 = int_to_ptr.vmem [resolvable:$true] %s64
      %70 = dma.hbm_to_vmem [thread:$0]  %s3, 256, %s65, [#allocation9], 64, 64, 4
    $region17: #{multi_head_attention.1} parent=1 // pred_fallthru
      _
    // Predicated region
    $region18: #{multi_head_attention.1} parent=1 // pred_check
      _
    $region19: #{multi_head_attention.1} parent=1 // pred_check_branch
      %72 = sbr.rel (0) target = $region21
    $region20: #{multi_head_attention.1} parent=1 // pred_region
      %s74 = ssub.s32 16, 16
      %75 = vsyncadd [#allocation9], %s74
      %s77 = sshll.u32 [#allocation10], 4
      %s78 = int_to_ptr.vmem [resolvable:$true] %s77
      %80 = dma.hbm_to_vmem [thread:$0]  %s4, 16, %s78, [#allocation9]
    $region21: #{multi_head_attention.1} parent=1 // pred_fallthru
      _
    // Predicated region
    $region22: #{multi_head_attention.1} parent=1 // pred_check
      _
    $region23: #{multi_head_attention.1} parent=1 // pred_check_branch
      %82 = sbr.rel (0) target = $region25
    $region24: #{multi_head_attention.1} parent=1 // pred_region
      %s84 = ssub.s32 256, 256
      %85 = vsyncadd [#allocation12], %s84
      %s86 = sshll.u32 [#allocation11], 4
      %s87 = int_to_ptr.vmem [resolvable:$true] %s86
      %92 = dma.hbm_to_vmem [thread:$0]  %s5, 256, %s87, [#allocation12], 64, 64, 4
    $region25: #{multi_head_attention.1} parent=1 // pred_fallthru
      _
    // Predicated region
    $region26: #{multi_head_attention.1} parent=1 // pred_check
      _
    $region27: #{multi_head_attention.1} parent=1 // pred_check_branch
      %94 = sbr.rel (0) target = $region29
    $region28: #{multi_head_attention.1} parent=1 // pred_region
      %s96 = ssub.s32 16, 16
      %97 = vsyncadd [#allocation12], %s96
      %s99 = sshll.u32 [#allocation13], 4
      %s100 = int_to_ptr.vmem [resolvable:$true] %s99
      %102 = dma.hbm_to_vmem [thread:$0]  %s6, 16, %s100, [#allocation12]
    $region29: #{multi_head_attention.1} parent=1 // pred_fallthru
      _
    // Predicated region
    $region30: #{multi_head_attention.1} parent=1 // pred_check
      _
    $region31: #{multi_head_attention.1} parent=1 // pred_check_branch
      %104 = sbr.rel (0) target = $region33
    $region32: #{multi_head_attention.1} parent=1 // pred_region
      %s106 = ssub.s32 256, 256
      %107 = vsyncadd [#allocation15], %s106
      %s108 = sshll.u32 [#allocation14], 4
      %s109 = int_to_ptr.vmem [resolvable:$true] %s108
      %114 = dma.hbm_to_vmem [thread:$0]  %s7, 256, %s109, [#allocation15], 64, 64, 4
    $region33: #{multi_head_attention.1} parent=1 // pred_fallthru
      _
    // Predicated region
    $region34: #{multi_head_attention.1} parent=1 // pred_check
      _
    $region35: #{multi_head_attention.1} parent=1 // pred_check_branch
      %116 = sbr.rel (0) target = $region37
    $region36: #{multi_head_attention.1} parent=1 // pred_region
      %s118 = ssub.s32 16, 16
      %119 = vsyncadd [#allocation15], %s118
      %s121 = sshll.u32 [#allocation16], 4
      %s122 = int_to_ptr.vmem [resolvable:$true] %s121
      %124 = dma.hbm_to_vmem [thread:$0]  %s8, 16, %s122, [#allocation15]
    $region37: #{multi_head_attention.1} parent=1 // pred_fallthru
      _
    // Predicated region
    $region38: #{multi_head_attention.1} parent=1 // pred_check
      _
    $region39: #{multi_head_attention.1} parent=1 // pred_check_branch
      %126 = sbr.rel (0) target = $region41
    $region40: #{multi_head_attention.1} parent=1 // pred_region
      %s128 = ssub.s32 1024, 1024
      %129 = vsyncadd [#allocation18], %s128
      %s130 = sshll.u32 [#allocation17], 4
      %s131 = int_to_ptr.vmem [resolvable:$true] %s130
      %136 = dma.hbm_to_vmem [thread:$0]  %s9, 1024, %s131, [#allocation18], 64, 64, 4
    $region41: #{multi_head_attention.1} parent=1 // pred_fallthru
      _
    // Predicated region
    $region42: #{multi_head_attention.1} parent=1 // pred_check
      _
    $region43: #{multi_head_attention.1} parent=1 // pred_check_branch
      %138 = sbr.rel (0) target = $region45
    $region44: #{multi_head_attention.1} parent=1 // pred_region
      %s140 = ssub.s32 16, 16
      %141 = vsyncadd [#allocation18], %s140
      %s143 = sshll.u32 [#allocation19], 4
      %s144 = int_to_ptr.vmem [resolvable:$true] %s143
      %146 = dma.hbm_to_vmem [thread:$0]  %s10, 16, %s144, [#allocation18]
    $region45: #{multi_head_attention.1} parent=1 // pred_fallthru
      _
    // Predicated region
    $region46: #{multi_head_attention.1} parent=1 // pred_check
      _
    $region47: #{multi_head_attention.1} parent=1 // pred_check_branch
      %148 = sbr.rel (0) target = $region49
    $region48: #{multi_head_attention.1} parent=1 // pred_region
      %149 = dma.done [#allocation3], 256
    $region49: #{multi_head_attention.1} parent=1 // pred_fallthru
      _
    // Predicated region
    $region50: #{multi_head_attention.1} parent=1 // pred_check
      _
    $region51: #{multi_head_attention.1} parent=1 // pred_check_branch
      %151 = sbr.rel (0) target = $region53
    $region52: #{multi_head_attention.1} parent=1 // pred_region
      %152 = dma.done [#allocation6], 256
    $region53: #{multi_head_attention.1} parent=1 // pred_fallthru
      _
    // Predicated region
    $region54: #{multi_head_attention.1} parent=1 // pred_check
      _
    $region55: #{multi_head_attention.1} parent=1 // pred_check_branch
      %154 = sbr.rel (0) target = $region57
    $region56: #{multi_head_attention.1} parent=1 // pred_region
      %155 = dma.done [#allocation6], 256
    $region57: #{multi_head_attention.1} parent=1 // pred_fallthru
      _
    // Predicated region
    $region58: #{multi_head_attention.1} parent=1 // pred_check
      _
    $region59: #{multi_head_attention.1} parent=1 // pred_check_branch
      %157 = sbr.rel (0) target = $region61
    $region60: #{multi_head_attention.1} parent=1 // pred_region
      %158 = dma.done [#allocation9], 256
    $region61: #{multi_head_attention.1} parent=1 // pred_fallthru
      _
    // Predicated region
    $region62: #{multi_head_attention.1} parent=1 // pred_check
      _
    $region63: #{multi_head_attention.1} parent=1 // pred_check_branch
      %160 = sbr.rel (0) target = $region65
    $region64: #{multi_head_attention.1} parent=1 // pred_region
      %161 = dma.done [#allocation9], 16
    $region65: #{multi_head_attention.1} parent=1 // pred_fallthru
      _
    // Predicated region
    $region66: #{multi_head_attention.1} parent=1 // pred_check
      _
    $region67: #{multi_head_attention.1} parent=1 // pred_check_branch
      %163 = sbr.rel (0) target = $region69
    $region68: #{multi_head_attention.1} parent=1 // pred_region
      %164 = dma.done [#allocation12], 256
    $region69: #{multi_head_attention.1} parent=1 // pred_fallthru
      _
    // Predicated region
    $region70: #{multi_head_attention.1} parent=1 // pred_check
      _
    $region71: #{multi_head_attention.1} parent=1 // pred_check_branch
      %166 = sbr.rel (0) target = $region73
    $region72: #{multi_head_attention.1} parent=1 // pred_region
      %167 = dma.done [#allocation12], 16
    $region73: #{multi_head_attention.1} parent=1 // pred_fallthru
      _
    // Predicated region
    $region74: #{multi_head_attention.1} parent=1 // pred_check
      _
    $region75: #{multi_head_attention.1} parent=1 // pred_check_branch
      %169 = sbr.rel (0) target = $region77
    $region76: #{multi_head_attention.1} parent=1 // pred_region
      %170 = dma.done [#allocation15], 256
    $region77: #{multi_head_attention.1} parent=1 // pred_fallthru
      _
    // Predicated region
    $region78: #{multi_head_attention.1} parent=1 // pred_check
      _
    $region79: #{multi_head_attention.1} parent=1 // pred_check_branch
      %172 = sbr.rel (0) target = $region81
    $region80: #{multi_head_attention.1} parent=1 // pred_region
      %173 = dma.done [#allocation15], 16
    $region81: #{multi_head_attention.1} parent=1 // pred_fallthru
      _
    // Predicated region
    $region82: #{multi_head_attention.1} parent=1 // pred_check
      _
    $region83: #{multi_head_attention.1} parent=1 // pred_check_branch
      %175 = sbr.rel (0) target = $region85
    $region84: #{multi_head_attention.1} parent=1 // pred_region
      %176 = dma.done [#allocation18], 1024
    $region85: #{multi_head_attention.1} parent=1 // pred_fallthru
      _
    // Predicated region
    $region86: #{multi_head_attention.1} parent=1 // pred_check
      _
    $region87: #{multi_head_attention.1} parent=1 // pred_check_branch
      %178 = sbr.rel (0) target = $region89
    $region88: #{multi_head_attention.1} parent=1 // pred_region
      %179 = dma.done [#allocation18], 16
    $region89: #{multi_head_attention.1} parent=1 // pred_fallthru
      _
    %v181 = vld [vmem:[#allocation2] sm:$0xff]
    %v182 = vld [vmem:[#allocation2 + $0x8] sm:$0xff]
    %v183 = vpack.c.bf16 %v182, %v181
    %v184 = vld [vmem:[#allocation5] sm:$0xff]
    %v185 = vld [vmem:[#allocation5 + $0x8] sm:$0xff]
    %v186 = vpack.c.bf16 %v185, %v184
    %v187 = vld [vmem:[#allocation7] sm:$0xff]
    %v188 = vld [vmem:[#allocation7 + $0x8] sm:$0xff]
    %v189 = vpack.c.bf16 %v188, %v187
    %v190 = vld [vmem:[#allocation8] sm:$0xf]
    %v191 = vld [vmem:[#allocation8 + $0x4] sm:$0xf]
    %v192 = vld [vmem:[#allocation8 + $0x8] sm:$0xf]
    %v193 = vld [vmem:[#allocation8 + $0xc] sm:$0xf]
    %v194 = vld [vmem:[#allocation10] sm:$0x1]
    %v196 = vlaneseq
    %v197 = vshrl.u32 %v196, 7
    %v198 = vsub.s32 0, %v197
    %v199 = vrot.slane %v194, %v198
    %v205 = vunpack.c.l.b16 %v190
    %v206 = vunpack.c.l.b16 %v191
    %v207 = vunpack.c.l.b16 %v192
    %v208 = vunpack.c.l.b16 %v193
    %v209 = vpack.c.b16 %v206, %v205
    %v210 = vpack.c.b16 %v208, %v207
    %vm213 = vcmask 261120
    %v215 = vsel %vm213, %v183, 0
    %217 = vmatprep.subr.bf16.mxu0 0
    %218 = vmatpush1.bf16.msra.mxu0 %v209
    %219 = vmatprep.subr.bf16.mxu0 0
    %220 = vmatpush1.bf16.msra.mxu0 %v210
    %221 = vmatprep.subr.bf16.mxu0 0
    %222 = vmatpush1.bf16.msra.mxu0 0
    %223 = vmatprep.subr.bf16.mxu0 0
    %224 = vmatpush1.bf16.msra.mxu0 0
    %225 = vmatprep.subr.bf16.mxu0 0
    %226 = vmatpush1.bf16.msra.mxu0 0
    %227 = vmatprep.subr.bf16.mxu0 0
    %228 = vmatpush1.bf16.msra.mxu0 0
    %229 = vmatprep.subr.bf16.mxu0 0
    %230 = vmatpush1.bf16.msra.mxu0 0
    %231 = vmatprep.subr.bf16.mxu0 0
    %232 = vmatpush1.bf16.msra.mxu0 0
    %233 = vmatprep.subr.bf16.mxu0 0
    %234 = vmatpush1.bf16.msra.mxu0 0
    %235 = vmatprep.subr.bf16.mxu0 0
    %236 = vmatpush1.bf16.msra.mxu0 0
    %237 = vmatprep.subr.bf16.mxu0 0
    %238 = vmatpush1.bf16.msra.mxu0 0
    %239 = vmatprep.subr.bf16.mxu0 0
    %240 = vmatpush1.bf16.msra.mxu0 0
    %241 = vmatprep.subr.bf16.mxu0 0
    %242 = vmatpush1.bf16.msra.mxu0 0
    %243 = vmatprep.subr.bf16.mxu0 0
    %244 = vmatpush1.bf16.msra.mxu0 0
    %245 = vmatprep.subr.bf16.mxu0 0
    %246 = vmatpush1.bf16.msra.mxu0 0
    %247 = vmatprep.subr.bf16.mxu0 0
    %248 = vmatpush1.bf16.msra.mxu0 0
    %249 = vmatprep.mubr.bf16.mxu0 0
    %250 = vmatmul.mubr.bf16.gmra.mrb[0].mxu0 %v215
    %v251 = vpop.f32.mrb[0].mxu0
    %v252 = vadd.f32 %v199, %v251
    %v253 = vpop.f32.mrb[0].mxu0
    %v254 = vpop.f32.mrb[0].mxu0
    %v255 = vadd.f32 %v199, %v254
    %v256 = vpop.f32.mrb[0].mxu0
    %257 = vdwg.mxu0
    %v258 = vld [vmem:[#allocation11] sm:$0xf]
    %v259 = vld [vmem:[#allocation11 + $0x4] sm:$0xf]
    %v260 = vld [vmem:[#allocation11 + $0x8] sm:$0xf]
    %v261 = vld [vmem:[#allocation11 + $0xc] sm:$0xf]
    %v262 = vld [vmem:[#allocation13] sm:$0x1]
    %v264 = vlaneseq
    %v265 = vshrl.u32 %v264, 7
    %v266 = vsub.s32 0, %v265
    %v267 = vrot.slane %v262, %v266
    %v273 = vunpack.c.l.b16 %v258
    %v274 = vunpack.c.l.b16 %v259
    %v275 = vunpack.c.l.b16 %v260
    %v276 = vunpack.c.l.b16 %v261
    %v277 = vpack.c.b16 %v274, %v273
    %v278 = vpack.c.b16 %v276, %v275
    %v282 = vsel %vm213, %v186, 0
    %284 = vmatprep.subr.bf16.mxu0 0
    %285 = vmatpush1.bf16.msra.mxu0 %v277
    %286 = vmatprep.subr.bf16.mxu0 0
    %287 = vmatpush1.bf16.msra.mxu0 %v278
    %288 = vmatprep.subr.bf16.mxu0 0
    %289 = vmatpush1.bf16.msra.mxu0 0
    %290 = vmatprep.subr.bf16.mxu0 0
    %291 = vmatpush1.bf16.msra.mxu0 0
    %292 = vmatprep.subr.bf16.mxu0 0
    %293 = vmatpush1.bf16.msra.mxu0 0
    %294 = vmatprep.subr.bf16.mxu0 0
    %295 = vmatpush1.bf16.msra.mxu0 0
    %296 = vmatprep.subr.bf16.mxu0 0
    %297 = vmatpush1.bf16.msra.mxu0 0
    %298 = vmatprep.subr.bf16.mxu0 0
    %299 = vmatpush1.bf16.msra.mxu0 0
    %300 = vmatprep.subr.bf16.mxu0 0
    %301 = vmatpush1.bf16.msra.mxu0 0
    %302 = vmatprep.subr.bf16.mxu0 0
    %303 = vmatpush1.bf16.msra.mxu0 0
    %304 = vmatprep.subr.bf16.mxu0 0
    %305 = vmatpush1.bf16.msra.mxu0 0
    %306 = vmatprep.subr.bf16.mxu0 0
    %307 = vmatpush1.bf16.msra.mxu0 0
    %308 = vmatprep.subr.bf16.mxu0 0
    %309 = vmatpush1.bf16.msra.mxu0 0
    %310 = vmatprep.subr.bf16.mxu0 0
    %311 = vmatpush1.bf16.msra.mxu0 0
    %312 = vmatprep.subr.bf16.mxu0 0
    %313 = vmatpush1.bf16.msra.mxu0 0
    %314 = vmatprep.subr.bf16.mxu0 0
    %315 = vmatpush1.bf16.msra.mxu0 0
    %316 = vmatprep.mubr.bf16.mxu0 0
    %317 = vmatmul.mubr.bf16.gmra.mrb[0].mxu0 %v282
    %v318 = vpop.f32.mrb[0].mxu0
    %v319 = vadd.f32 %v267, %v318
    %v320 = vpop.f32.mrb[0].mxu0
    %v321 = vpop.f32.mrb[0].mxu0
    %v322 = vadd.f32 %v267, %v321
    %v323 = vpop.f32.mrb[0].mxu0
    %324 = vdwg.mxu0
    %v325 = vld [vmem:[#allocation14] sm:$0xf]
    %v326 = vld [vmem:[#allocation14 + $0x4] sm:$0xf]
    %v327 = vld [vmem:[#allocation14 + $0x8] sm:$0xf]
    %v328 = vld [vmem:[#allocation14 + $0xc] sm:$0xf]
    %v329 = vld [vmem:[#allocation16] sm:$0x1]
    %v331 = vlaneseq
    %v332 = vshrl.u32 %v331, 7
    %v333 = vsub.s32 0, %v332
    %v334 = vrot.slane %v329, %v333
    %v340 = vunpack.c.l.b16 %v325
    %v341 = vunpack.c.l.b16 %v326
    %v342 = vunpack.c.l.b16 %v327
    %v343 = vunpack.c.l.b16 %v328
    %v344 = vpack.c.b16 %v341, %v340
    %v345 = vpack.c.b16 %v343, %v342
    %v349 = vsel %vm213, %v189, 0
    %351 = vmatprep.subr.bf16.mxu0 0
    %352 = vmatpush1.bf16.msra.mxu0 %v344
    %353 = vmatprep.subr.bf16.mxu0 0
    %354 = vmatpush1.bf16.msra.mxu0 %v345
    %355 = vmatprep.subr.bf16.mxu0 0
    %356 = vmatpush1.bf16.msra.mxu0 0
    %357 = vmatprep.subr.bf16.mxu0 0
    %358 = vmatpush1.bf16.msra.mxu0 0
    %359 = vmatprep.subr.bf16.mxu0 0
    %360 = vmatpush1.bf16.msra.mxu0 0
    %361 = vmatprep.subr.bf16.mxu0 0
    %362 = vmatpush1.bf16.msra.mxu0 0
    %363 = vmatprep.subr.bf16.mxu0 0
    %364 = vmatpush1.bf16.msra.mxu0 0
    %365 = vmatprep.subr.bf16.mxu0 0
    %366 = vmatpush1.bf16.msra.mxu0 0
    %367 = vmatprep.subr.bf16.mxu0 0
    %368 = vmatpush1.bf16.msra.mxu0 0
    %369 = vmatprep.subr.bf16.mxu0 0
    %370 = vmatpush1.bf16.msra.mxu0 0
    %371 = vmatprep.subr.bf16.mxu0 0
    %372 = vmatpush1.bf16.msra.mxu0 0
    %373 = vmatprep.subr.bf16.mxu0 0
    %374 = vmatpush1.bf16.msra.mxu0 0
    %375 = vmatprep.subr.bf16.mxu0 0
    %376 = vmatpush1.bf16.msra.mxu0 0
    %377 = vmatprep.subr.bf16.mxu0 0
    %378 = vmatpush1.bf16.msra.mxu0 0
    %379 = vmatprep.subr.bf16.mxu0 0
    %380 = vmatpush1.bf16.msra.mxu0 0
    %381 = vmatprep.subr.bf16.mxu0 0
    %382 = vmatpush1.bf16.msra.mxu0 0
    %383 = vmatprep.mubr.bf16.mxu0 0
    %384 = vmatmul.mubr.bf16.gmra.mrb[0].mxu0 %v349
    %v385 = vpop.f32.mrb[0].mxu0
    %v386 = vadd.f32 %v334, %v385
    %v387 = vpop.f32.mrb[0].mxu0
    %v388 = vpop.f32.mrb[0].mxu0
    %v389 = vadd.f32 %v334, %v388
    %v390 = vpop.f32.mrb[0].mxu0
    %391 = vdwg.mxu0
    %v392 = vpack.c.bf16 %v252, %v252
    %v393 = vpack.c.bf16 %v255, %v255
    %v394 = vpack.c.bf16 %v319, %v319
    %v395 = vpack.c.bf16 %v322, %v322
    %396 = vmatprep.subr.bf16.mxu0 0
    %397 = vmatpush1.bf16.xpose.msra.mxu0 %v394
    %398 = vmatprep.subr.bf16.mxu0 0
    %399 = vmatpush1.bf16.xpose.msra.mxu0 0
    %400 = vmatprep.subr.bf16.mxu0 0
    %401 = vmatpush1.bf16.xpose.msra.mxu0 0
    %402 = vmatprep.subr.bf16.mxu0 0
    %403 = vmatpush1.bf16.xpose.msra.mxu0 0
    %404 = vmatprep.subr.bf16.mxu0 0
    %405 = vmatpush1.bf16.xpose.msra.mxu0 0
    %406 = vmatprep.subr.bf16.mxu0 0
    %407 = vmatpush1.bf16.xpose.msra.mxu0 0
    %408 = vmatprep.subr.bf16.mxu0 0
    %409 = vmatpush1.bf16.xpose.msra.mxu0 0
    %410 = vmatprep.subr.bf16.mxu0 0
    %411 = vmatpush1.bf16.xpose.msra.mxu0 0
    %412 = vmatprep.subr.bf16.mxu0 0
    %413 = vmatpush1.bf16.xpose.msra.mxu0 0
    %414 = vmatprep.subr.bf16.mxu0 0
    %415 = vmatpush1.bf16.xpose.msra.mxu0 0
    %416 = vmatprep.subr.bf16.mxu0 0
    %417 = vmatpush1.bf16.xpose.msra.mxu0 0
    %418 = vmatprep.subr.bf16.mxu0 0
    %419 = vmatpush1.bf16.xpose.msra.mxu0 0
    %420 = vmatprep.subr.bf16.mxu0 0
    %421 = vmatpush1.bf16.xpose.msra.mxu0 0
    %422 = vmatprep.subr.bf16.mxu0 0
    %423 = vmatpush1.bf16.xpose.msra.mxu0 0
    %424 = vmatprep.subr.bf16.mxu0 0
    %425 = vmatpush1.bf16.xpose.msra.mxu0 0
    %426 = vmatprep.subr.bf16.mxu0 0
    %427 = vmatpush1.bf16.xpose.msra.mxu0 0
    %428 = vmatprep.mubr.bf16.mxu0 0
    %429 = vmatmul.mubr.bf16.gmra.mrb[0].mxu0 %v392
    %v430 = vpop.f32.mrb[0].mxu0
    %v431 = vadd.f32 0.0, %v430
    %v432 = vpop.f32.mrb[0].mxu0
    %v433 = vpop.f32.mrb[0].mxu0
    %v434 = vpop.f32.mrb[0].mxu0
    %435 = vdwg.mxu0
    %436 = vmatprep.subr.bf16.mxu0 0
    %437 = vmatpush1.bf16.xpose.msra.mxu0 %v395
    %438 = vmatprep.subr.bf16.mxu0 0
    %439 = vmatpush1.bf16.xpose.msra.mxu0 0
    %440 = vmatprep.subr.bf16.mxu0 0
    %441 = vmatpush1.bf16.xpose.msra.mxu0 0
    %442 = vmatprep.subr.bf16.mxu0 0
    %443 = vmatpush1.bf16.xpose.msra.mxu0 0
    %444 = vmatprep.subr.bf16.mxu0 0
    %445 = vmatpush1.bf16.xpose.msra.mxu0 0
    %446 = vmatprep.subr.bf16.mxu0 0
    %447 = vmatpush1.bf16.xpose.msra.mxu0 0
    %448 = vmatprep.subr.bf16.mxu0 0
    %449 = vmatpush1.bf16.xpose.msra.mxu0 0
    %450 = vmatprep.subr.bf16.mxu0 0
    %451 = vmatpush1.bf16.xpose.msra.mxu0 0
    %452 = vmatprep.subr.bf16.mxu0 0
    %453 = vmatpush1.bf16.xpose.msra.mxu0 0
    %454 = vmatprep.subr.bf16.mxu0 0
    %455 = vmatpush1.bf16.xpose.msra.mxu0 0
    %456 = vmatprep.subr.bf16.mxu0 0
    %457 = vmatpush1.bf16.xpose.msra.mxu0 0
    %458 = vmatprep.subr.bf16.mxu0 0
    %459 = vmatpush1.bf16.xpose.msra.mxu0 0
    %460 = vmatprep.subr.bf16.mxu0 0
    %461 = vmatpush1.bf16.xpose.msra.mxu0 0
    %462 = vmatprep.subr.bf16.mxu0 0
    %463 = vmatpush1.bf16.xpose.msra.mxu0 0
    %464 = vmatprep.subr.bf16.mxu0 0
    %465 = vmatpush1.bf16.xpose.msra.mxu0 0
    %466 = vmatprep.subr.bf16.mxu0 0
    %467 = vmatpush1.bf16.xpose.msra.mxu0 0
    %468 = vmatprep.mubr.bf16.mxu0 0
    %469 = vmatmul.mubr.bf16.gmra.mrb[0].mxu0 %v393
    %v470 = vpop.f32.mrb[0].mxu0
    %v471 = vadd.f32 0.0, %v470
    %v472 = vpop.f32.mrb[0].mxu0
    %v473 = vpop.f32.mrb[0].mxu0
    %v474 = vpop.f32.mrb[0].mxu0
    %475 = vdwg.mxu0
    %vm476 = vcmask 64512
    %v477 = vsel %vm476, %v431, -inf
    %478 = vmax.xlane.f32.xlu0 %v477
    %v479 = vpop.xlane.xlu0 %478
    %v480 = vsel %vm476, %v471, -inf
    %481 = vmax.xlane.f32.xlu0 %v480
    %v482 = vpop.xlane.xlu0 %481
    %v483 = vsub.f32 %v431, %v479
    %v484 = vsub.f32 %v471, %v482
    %v485 = vpack.c.bf16 %v483, %v483
    %v486 = vpack.c.bf16 %v484, %v484
    %v488 = vmul.bf16 %v485, 1069105081
    %v489 = vpow.bf16.pop %v488
    %v491 = vmul.bf16 %v486, 1069105081
    %v492 = vpow.bf16.pop %v491
    %v493 = vunpack.c.l.bf16 %v489
    %v494 = vunpack.c.l.bf16 %v492
    %v495 = vsel %vm476, %v493, 0.0
    %496 = vadd.xlane.f32.xlu0 %v495
    %v497 = vpop.xlane.xlu0 %496
    %v498 = vsel %vm476, %v494, 0.0
    %499 = vadd.xlane.f32.xlu0 %v498
    %v500 = vpop.xlane.xlu0 %499
    %v501 = vpack.c.bf16 %v386, %v386
    %v502 = vpack.c.bf16 %v389, %v389
    %v504 = vsel %vm476, %v489, 0
    %vm506 = vcmask 1043456
    %v508 = vsel %vm506, %v501, 0
    %510 = vmatprep.subr.bf16.mxu0 0
    %511 = vmatpush1.bf16.msra.mxu0 %v508
    %512 = vmatprep.subr.bf16.mxu0 0
    %513 = vmatpush1.bf16.msra.mxu0 0
    %514 = vmatprep.subr.bf16.mxu0 0
    %515 = vmatpush1.bf16.msra.mxu0 0
    %516 = vmatprep.subr.bf16.mxu0 0
    %517 = vmatpush1.bf16.msra.mxu0 0
    %518 = vmatprep.subr.bf16.mxu0 0
    %519 = vmatpush1.bf16.msra.mxu0 0
    %520 = vmatprep.subr.bf16.mxu0 0
    %521 = vmatpush1.bf16.msra.mxu0 0
    %522 = vmatprep.subr.bf16.mxu0 0
    %523 = vmatpush1.bf16.msra.mxu0 0
    %524 = vmatprep.subr.bf16.mxu0 0
    %525 = vmatpush1.bf16.msra.mxu0 0
    %526 = vmatprep.subr.bf16.mxu0 0
    %527 = vmatpush1.bf16.msra.mxu0 0
    %528 = vmatprep.subr.bf16.mxu0 0
    %529 = vmatpush1.bf16.msra.mxu0 0
    %530 = vmatprep.subr.bf16.mxu0 0
    %531 = vmatpush1.bf16.msra.mxu0 0
    %532 = vmatprep.subr.bf16.mxu0 0
    %533 = vmatpush1.bf16.msra.mxu0 0
    %534 = vmatprep.subr.bf16.mxu0 0
    %535 = vmatpush1.bf16.msra.mxu0 0
    %536 = vmatprep.subr.bf16.mxu0 0
    %537 = vmatpush1.bf16.msra.mxu0 0
    %538 = vmatprep.subr.bf16.mxu0 0
    %539 = vmatpush1.bf16.msra.mxu0 0
    %540 = vmatprep.subr.bf16.mxu0 0
    %541 = vmatpush1.bf16.msra.mxu0 0
    %542 = vmatprep.mubr.bf16.mxu0 0
    %543 = vmatmul.mubr.bf16.gmra.mrb[0].mxu0 %v504
    %v544 = vpop.f32.mrb[0].mxu0
    %v545 = vadd.f32 0.0, %v544
    %v546 = vpop.f32.mrb[0].mxu0
    %v547 = vpop.f32.mrb[0].mxu0
    %v548 = vpop.f32.mrb[0].mxu0
    %549 = vdwg.mxu0
    %v551 = vsel %vm476, %v492, 0
    %v554 = vsel %vm506, %v502, 0
    %556 = vmatprep.subr.bf16.mxu0 0
    %557 = vmatpush1.bf16.msra.mxu0 %v554
    %558 = vmatprep.subr.bf16.mxu0 0
    %559 = vmatpush1.bf16.msra.mxu0 0
    %560 = vmatprep.subr.bf16.mxu0 0
    %561 = vmatpush1.bf16.msra.mxu0 0
    %562 = vmatprep.subr.bf16.mxu0 0
    %563 = vmatpush1.bf16.msra.mxu0 0
    %564 = vmatprep.subr.bf16.mxu0 0
    %565 = vmatpush1.bf16.msra.mxu0 0
    %566 = vmatprep.subr.bf16.mxu0 0
    %567 = vmatpush1.bf16.msra.mxu0 0
    %568 = vmatprep.subr.bf16.mxu0 0
    %569 = vmatpush1.bf16.msra.mxu0 0
    %570 = vmatprep.subr.bf16.mxu0 0
    %571 = vmatpush1.bf16.msra.mxu0 0
    %572 = vmatprep.subr.bf16.mxu0 0
    %573 = vmatpush1.bf16.msra.mxu0 0
    %574 = vmatprep.subr.bf16.mxu0 0
    %575 = vmatpush1.bf16.msra.mxu0 0
    %576 = vmatprep.subr.bf16.mxu0 0
    %577 = vmatpush1.bf16.msra.mxu0 0
    %578 = vmatprep.subr.bf16.mxu0 0
    %579 = vmatpush1.bf16.msra.mxu0 0
    %580 = vmatprep.subr.bf16.mxu0 0
    %581 = vmatpush1.bf16.msra.mxu0 0
    %582 = vmatprep.subr.bf16.mxu0 0
    %583 = vmatpush1.bf16.msra.mxu0 0
    %584 = vmatprep.subr.bf16.mxu0 0
    %585 = vmatpush1.bf16.msra.mxu0 0
    %586 = vmatprep.subr.bf16.mxu0 0
    %587 = vmatpush1.bf16.msra.mxu0 0
    %588 = vmatprep.mubr.bf16.mxu0 0
    %589 = vmatmul.mubr.bf16.gmra.mrb[0].mxu0 %v551
    %v590 = vpop.f32.mrb[0].mxu0
    %v591 = vadd.f32 0.0, %v590
    %v592 = vpop.f32.mrb[0].mxu0
    %v593 = vpop.f32.mrb[0].mxu0
    %v594 = vpop.f32.mrb[0].mxu0
    %595 = vdwg.mxu0
    %v596 = vrcp.pop %v497
    %v597 = vrcp.pop %v500
    %v598 = vmul.f32 %v545, %v596
    %v599 = vmul.f32 %v591, %v597
    %v600 = vpack.c.bf16 %v599, %v598
    %v601 = vld [vmem:[#allocation17] sm:$0xf]
    %v602 = vld [vmem:[#allocation17 + $0x4] sm:$0xf]
    %v603 = vld [vmem:[#allocation17 + $0x8] sm:$0xf]
    %v604 = vld [vmem:[#allocation17 + $0xc] sm:$0xf]
    %v605 = vld [vmem:[#allocation17 + $0x10] sm:$0xf]
    %v606 = vld [vmem:[#allocation17 + $0x14] sm:$0xf]
    %v607 = vld [vmem:[#allocation17 + $0x18] sm:$0xf]
    %v608 = vld [vmem:[#allocation17 + $0x1c] sm:$0xf]
    %v609 = vld [vmem:[#allocation17 + $0x20] sm:$0xf]
    %v610 = vld [vmem:[#allocation17 + $0x24] sm:$0xf]
    %v611 = vld [vmem:[#allocation17 + $0x28] sm:$0xf]
    %v612 = vld [vmem:[#allocation17 + $0x2c] sm:$0xf]
    %v613 = vld [vmem:[#allocation17 + $0x30] sm:$0xf]
    %v614 = vld [vmem:[#allocation17 + $0x34] sm:$0xf]
    %v615 = vld [vmem:[#allocation17 + $0x38] sm:$0xf]
    %v616 = vld [vmem:[#allocation17 + $0x3c] sm:$0xf]
    %v617 = vld [vmem:[#allocation19] sm:$0x1]
    %v619 = vlaneseq
    %v620 = vshrl.u32 %v619, 7
    %v621 = vsub.s32 0, %v620
    %v622 = vrot.slane %v617, %v621
    %v640 = vunpack.c.l.b16 %v601
    %v641 = vunpack.c.l.b16 %v602
    %v642 = vunpack.c.l.b16 %v603
    %v643 = vunpack.c.l.b16 %v604
    %v644 = vunpack.c.l.b16 %v605
    %v645 = vunpack.c.l.b16 %v606
    %v646 = vunpack.c.l.b16 %v607
    %v647 = vunpack.c.l.b16 %v608
    %v648 = vunpack.c.l.b16 %v609
    %v649 = vunpack.c.l.b16 %v610
    %v650 = vunpack.c.l.b16 %v611
    %v651 = vunpack.c.l.b16 %v612
    %v652 = vunpack.c.l.b16 %v613
    %v653 = vunpack.c.l.b16 %v614
    %v654 = vunpack.c.l.b16 %v615
    %v655 = vunpack.c.l.b16 %v616
    %v656 = vpack.c.b16 %v641, %v640
    %v657 = vpack.c.b16 %v643, %v642
    %v658 = vpack.c.b16 %v645, %v644
    %v659 = vpack.c.b16 %v647, %v646
    %v660 = vpack.c.b16 %v649, %v648
    %v661 = vpack.c.b16 %v651, %v650
    %v662 = vpack.c.b16 %v653, %v652
    %v663 = vpack.c.b16 %v655, %v654
    %672 = vmatprep.subr.bf16.mxu0 0
    %673 = vmatpush1.bf16.msra.mxu0 %v656
    %674 = vmatprep.subr.bf16.mxu0 0
    %675 = vmatpush1.bf16.msra.mxu0 %v657
    %676 = vmatprep.subr.bf16.mxu0 0
    %677 = vmatpush1.bf16.msra.mxu0 %v658
    %678 = vmatprep.subr.bf16.mxu0 0
    %679 = vmatpush1.bf16.msra.mxu0 %v659
    %680 = vmatprep.subr.bf16.mxu0 0
    %681 = vmatpush1.bf16.msra.mxu0 %v660
    %682 = vmatprep.subr.bf16.mxu0 0
    %683 = vmatpush1.bf16.msra.mxu0 %v661
    %684 = vmatprep.subr.bf16.mxu0 0
    %685 = vmatpush1.bf16.msra.mxu0 %v662
    %686 = vmatprep.subr.bf16.mxu0 0
    %687 = vmatpush1.bf16.msra.mxu0 %v663
    %688 = vmatprep.subr.bf16.mxu0 0
    %689 = vmatpush1.bf16.msra.mxu0 0
    %690 = vmatprep.subr.bf16.mxu0 0
    %691 = vmatpush1.bf16.msra.mxu0 0
    %692 = vmatprep.subr.bf16.mxu0 0
    %693 = vmatpush1.bf16.msra.mxu0 0
    %694 = vmatprep.subr.bf16.mxu0 0
    %695 = vmatpush1.bf16.msra.mxu0 0
    %696 = vmatprep.subr.bf16.mxu0 0
    %697 = vmatpush1.bf16.msra.mxu0 0
    %698 = vmatprep.subr.bf16.mxu0 0
    %699 = vmatpush1.bf16.msra.mxu0 0
    %700 = vmatprep.subr.bf16.mxu0 0
    %701 = vmatpush1.bf16.msra.mxu0 0
    %702 = vmatprep.subr.bf16.mxu0 0
    %703 = vmatpush1.bf16.msra.mxu0 0
    %704 = vmatprep.mubr.bf16.mxu0 0
    %705 = vmatmul.mubr.bf16.gmra.mrb[0].mxu0 %v600
    %v706 = vpop.f32.mrb[0].mxu0
    %v707 = vadd.f32 %v622, %v706
    %v708 = vpop.f32.mrb[0].mxu0
    %v709 = vpop.f32.mrb[0].mxu0
    %v710 = vadd.f32 %v622, %v709
    %v711 = vpop.f32.mrb[0].mxu0
    %712 = vdwg.mxu0
    %713 = vst.msk [vmem:[#allocation20] sm:$0xff] %vm213, %v707
    %714 = vst.msk [vmem:[#allocation20 + $0x8] sm:$0xff] %vm213, %v710
    // Predicated region
    $region90: #{multi_head_attention.1} parent=1 // pred_check
      _
    $region91: #{multi_head_attention.1} parent=1 // pred_check_branch
      %716 = sbr.rel (0) target = $region93
    $region92: #{multi_head_attention.1} parent=1 // pred_region
      %s718 = ssub.s32 256, 256
      %719 = vsyncadd [#allocation4], %s718
      %s720 = sshll.u32 [#allocation20], 4
      %s721 = int_to_ptr.vmem [resolvable:$true] %s720
      %726 = dma.vmem_to_hbm [thread:$0]  %s721, 256, %s11, [#allocation4], 128, 128, 8
    $region93: #{multi_head_attention.1} parent=1 // pred_fallthru
      _
    // Predicated region
    $region94: #{multi_head_attention.1} parent=1 // pred_check
      _
    $region95: #{multi_head_attention.1} parent=1 // pred_check_branch
      %728 = sbr.rel (0) target = $region97
    $region96: #{multi_head_attention.1} parent=1 // pred_region
      %729 = dma.done [#allocation4], 256
    $region97: #{multi_head_attention.1} parent=1 // pred_fallthru
      _
    %730 = vsyncpa [#allocation3], 1
    %731 = vsyncpa [#allocation6], 1
    %732 = vsyncpa [#allocation9], 1
    %733 = vsyncpa [#allocation12], 1
    %734 = vsyncpa [#allocation15], 1
    %735 = vsyncpa [#allocation18], 1
    %736 = vsyncpa [#allocation4], 1

</llo_original>
